<compile_context>
chip_gen: v7x
topology: tpu7x:2x2x1
jax: 0.10.0
libtpu: 0.0.40
codegen_flags: <defaults>
</compile_context>

<pallas_src>
import math
import jax
import jax.numpy as jnp
from jax.experimental import pallas as pl
from jax.experimental.pallas import tpu as pltpu


def _cls_logits_kernel(x_ref, w_ref, o_ref):
    """One fused matmul per (batch, column-group, row-chunk) grid step.

    x_ref: (1, Hc, KP)  bf16  dy-stacked, halo-replicated input slab for this
                              column group (+ two constant-1 bias lanes in the
                              K padding).
    w_ref: (KP, LW)     bf16  shift-invariant weight block (same for every
                              column group); rows K_real/K_real+1 hold the
                              hi/lo split of the bias.
    o_ref: (1, Hc, LW)  f32   Wt output pixels packed per 128-lane block.
    """
    o_ref[0] = jnp.dot(x_ref[0], w_ref[...], preferred_element_type=jnp.float32)


def cls_logits_conv(x_nchw, weight, bias):
    """Conv2d(Cin, Cout, k=3, s=1, p=1) matching PyTorch semantics.

    x_nchw: (N, Cin, H, W) float32
    weight: (Cout, Cin, 3, 3) float32 (PyTorch OIHW)
    bias:   (Cout,) float32
    returns (N, Cout, H, W) float32
    """
    N, Cin, H, W = x_nchw.shape
    Cout = weight.shape[0]

    # ---- layout parameters --------------------------------------------------
    Wt = max(1, 128 // Cout)                     # output pixels packed per lane block
    LW = ((Wt * Cout + 127) // 128) * 128        # lanes per column group (=128 here)
    NG = -(-W // Wt)                             # number of column groups
    Wp = NG * Wt                                 # width padded to a multiple of Wt
    Cs = 3 * Cin                                 # dy-stacked channels per column
    K_real = (Wt + 2) * Cs                       # real contraction length per group
    KP = ((K_real + 2 + 127) // 128) * 128       # +2 bias lanes, pad K to 128-multiple
    Hc = min(64, 8 * (-(-H // 8)))               # 8-aligned row chunk
    Hp = (-(-H // Hc)) * Hc                      # height padded to a multiple of Hc

    # ---- input staging (wrapper-side layout glue, plain JAX) ---------------
    x_nhwc = jnp.transpose(x_nchw, (0, 2, 3, 1))                        # NHWC
    x_pad = jnp.pad(x_nhwc, ((0, 0), (1, Hp - H + 1), (1, Wp - W + 1), (0, 0)))
    # dy-stack: x_stk[n, h, w, dy*Cin + c] = x_pad[n, h+dy, w, c]
    x_stk = jnp.stack([x_pad[:, dy:dy + Hp] for dy in range(3)], axis=3)
    x_stk = x_stk.reshape(N, Hp, Wp + 2, Cs)
    # halo-replicated column groups: group g covers padded columns g*Wt .. g*Wt+Wt+1
    col_idx = jnp.arange(NG)[:, None] * Wt + jnp.arange(Wt + 2)[None, :]
    x_grp = x_stk[:, :, col_idx, :].reshape(N, Hp, NG, K_real)
    # K padding: two constant-1 bias lanes, zeros elsewhere -> aligned full loads
    ones = jnp.ones((N, Hp, NG, 1), x_grp.dtype)
    pad0 = jnp.zeros((N, Hp, NG, KP - K_real - 2), x_grp.dtype)
    x_grp = jnp.concatenate([x_grp, ones, ones, pad0], axis=-1)
    x_grp = x_grp.reshape(N, Hp, NG * KP).astype(jnp.bfloat16)

    # ---- shift-invariant weight block (identical for every column group) ---
    #   w_blk[j*Cs + dy*Cin + c, p*Cout + o] = weight[o, c, dy, j-p]  (0 <= j-p <= 2)
    w_hwio = jnp.transpose(weight, (2, 3, 1, 0))                        # (3, 3, Cin, Cout)
    w_blk = jnp.zeros((KP, LW), jnp.float32)
    for p in range(Wt):
        for dx in range(3):
            j = p + dx
            w_blk = w_blk.at[j * Cs:(j + 1) * Cs, p * Cout:(p + 1) * Cout].set(
                w_hwio[:, dx, :, :].reshape(Cs, Cout))
    # bias folded into the matmul via a hi/lo bf16 split (f32-accurate bias)
    b_hi = bias.astype(jnp.bfloat16).astype(jnp.float32)
    b_lo = bias - b_hi
    w_blk = w_blk.at[K_real, :Wt * Cout].set(jnp.tile(b_hi, Wt))
    w_blk = w_blk.at[K_real + 1, :Wt * Cout].set(jnp.tile(b_lo, Wt))
    w_blk = w_blk.astype(jnp.bfloat16)

    # ---- kernel launch ------------------------------------------------------
    # VMEM per step: weight (KP*LW*2B) + x (Hc*KP*2B) + out (Hc*LW*4B), double
    # buffered -> a few MiB even at real FPN shapes; fits v7x's 64 MiB easily.
    out = pl.pallas_call(
        _cls_logits_kernel,
        out_shape=jax.ShapeDtypeStruct((N, Hp, NG * LW), jnp.float32),
        grid_spec=pltpu.PrefetchScalarGridSpec(
            num_scalar_prefetch=0,
            grid=(N, NG, Hp // Hc),
            in_specs=[
                pl.BlockSpec((1, Hc, KP), lambda n, g, r: (n, r, g)),
                pl.BlockSpec((KP, LW), lambda n, g, r: (0, 0)),   # grid-invariant
            ],
            out_specs=pl.BlockSpec((1, Hc, LW), lambda n, g, r: (n, r, g)),
        ),
        compiler_params=pltpu.CompilerParams(
            dimension_semantics=("parallel", "parallel", "parallel"),
            vmem_limit_bytes=32 * 1024 * 1024),
    )(x_grp, w_blk)

    # ---- unpack pixel packing and lane/spatial padding ----------------------
    out = out.reshape(N, Hp, NG, LW)[..., :Wt * Cout]
    out = out.reshape(N, Hp, Wp, Cout)[:, :H, :W, :]
    return jnp.transpose(out, (0, 3, 1, 2))                            # NCHW


if __name__ == "__main__":
    # Small shapes consistent with the detection-head forward.
    N, Cin, H, W = 2, 4, 16, 16
    num_anchors, num_classes = 9, 3
    Cout = num_anchors * num_classes

    key = jax.random.PRNGKey(0)
    kx, kw = jax.random.split(key)
    x = jax.random.normal(kx, (N, Cin, H, W), dtype=jnp.float32)

    # Deterministic parameter init matching the PyTorch module's __init__.
    prior_probability = 0.01
    weight = 0.01 * jax.random.normal(kw, (Cout, Cin, 3, 3), dtype=jnp.float32)
    bias = jnp.full((Cout,), -math.log((1 - prior_probability) / prior_probability),
                    dtype=jnp.float32)

    out = jax.jit(cls_logits_conv)(x, weight, bias)
    out = jax.block_until_ready(out)

    # Correctness check against XLA's conv (f32 reference; kernel uses bf16 operands).
    ref = jax.lax.conv_general_dilated(
        x, weight, window_strides=(1, 1), padding="SAME",
        dimension_numbers=("NCHW", "OIHW", "NCHW"))
    ref = ref + bias[None, :, None, None]
    assert out.shape == (N, Cout, H, W)
    assert jnp.allclose(out, ref, atol=1e-2, rtol=1e-2), \
        float(jnp.max(jnp.abs(out - ref)))

    print("KERNEL_OK")
</pallas_src>

<mosaic_0001>
module attributes {stable_mosaic.version = 11 : i64} {
  func.func @_cls_logits_kernel(%arg0: i32, %arg1: i32, %arg2: i32, %arg3: memref<1x16x128xbf16, #tpu.memory_space<vmem>>, %arg4: memref<128x128xbf16, #tpu.memory_space<vmem>>, %arg5: memref<1x16x128xf32, #tpu.memory_space<vmem>>) attributes {dimension_semantics = [#tpu.dimension_semantics<parallel>, #tpu.dimension_semantics<parallel>, #tpu.dimension_semantics<parallel>], iteration_bounds = array<i64: 2, 4, 1>, scalar_prefetch = 0 : i64, scratch_operands = 0 : i64, tpu.core_type = #tpu.core_type<tc>, window_params = [{transform_indices = @transform_0, window_bounds = array<i64: 1, 16, 128>}, {pipeline_mode = #tpu.pipeline_mode<synchronous>, transform_indices = @transform_1, window_bounds = array<i64: 128, 128>}, {transform_indices = @transform_2, window_bounds = array<i64: 1, 16, 128>}]} {
    %c0 = arith.constant 0 : index
    %c0_0 = arith.constant 0 : index
    %c0_1 = arith.constant 0 : index
    %0 = vector.load %arg3[%c0, %c0_0, %c0_1] : memref<1x16x128xbf16, #tpu.memory_space<vmem>>, vector<1x16x128xbf16>
    %1 = vector.shape_cast %0 : vector<1x16x128xbf16> to vector<16x128xbf16>
    %c0_2 = arith.constant 0 : index
    %c0_3 = arith.constant 0 : index
    %2 = vector.load %arg4[%c0_2, %c0_3] : memref<128x128xbf16, #tpu.memory_space<vmem>>, vector<128x128xbf16>
    %cst = arith.constant dense<0.000000e+00> : vector<16x128xf32>
    %3 = tpu.matmul %1, %2, %cst {dimension_numbers = #tpu.dot_dimension_numbers<[1], [0], [0], [1], [0, 0, 1, 1], [], []>} : vector<16x128xbf16>, vector<128x128xbf16>, vector<16x128xf32> -> vector<16x128xf32>
    %c0_4 = arith.constant 0 : index
    %c0_5 = arith.constant 0 : index
    %c0_6 = arith.constant 0 : index
    %4 = vector.load %arg5[%c0_4, %c0_5, %c0_6] : memref<1x16x128xf32, #tpu.memory_space<vmem>>, vector<1x16x128xf32>
    %5 = vector.shape_cast %4 : vector<1x16x128xf32> to vector<16x128xf32>
    %6 = vector.shape_cast %3 : vector<16x128xf32> to vector<1x16x128xf32>
    tpu.vector_store %arg5[%c0_4, %c0_5, %c0_6], %6 {strides = array<i32>} : memref<1x16x128xf32, #tpu.memory_space<vmem>>, vector<1x16x128xf32>,
    return
  }
  func.func @transform_0(%arg0: i32, %arg1: i32, %arg2: i32) -> (i32, i32, i32) {
    %c0_i32 = arith.constant 0 : i32
    return %arg0, %arg2, %arg1 : i32, i32, i32
  }
  func.func @transform_1(%arg0: i32, %arg1: i32, %arg2: i32) -> (i32, i32) {
    %c0_i32 = arith.constant 0 : i32
    %c0_i32_0 = arith.constant 0 : i32
    %c0_i32_1 = arith.constant 0 : i32
    return %c0_i32, %c0_i32_0 : i32, i32
  }
  func.func @transform_2(%arg0: i32, %arg1: i32, %arg2: i32) -> (i32, i32, i32) {
    %c0_i32 = arith.constant 0 : i32
    return %arg0, %arg2, %arg1 : i32, i32, i32
  }
}

</mosaic_0001>

<llo_original>
// kernel: tile.18
$region0: #{tile.18}
  #allocation0 [shape = 's32[1]{0}', space=sflag, size = 0x4, scoped, tag = 'scoped memory for tile.18']
  %s0 = inlined_call_operand.vmem [shape: bf16[27], index: 0, kind: input, shape index: {}]
  %s1 = inlined_call_operand.vmem [shape: bf16[4,27], index: 1, kind: output, shape index: {}]
  // Predicated region
  $region2: #{tile.18} parent=0 // pred_check
    _
  $region3: #{tile.18} parent=0 // pred_check_branch
    %3 = sbr.rel (0) target = $region5
  $region4: #{tile.18} parent=0 // pred_region
    _
  $region5: #{tile.18} parent=0 // pred_fallthru
    _
  %v4 = vld [vmem:[%s0] ss:$0 sm:$0xff]
  %v5 = vunpack.i.l.bf16 %v4
  %v7 = vunpack.i.h.bf16 %v4
  %v9 = vpack.c.bf16 0.0, %v5
  %10 = vst [vmem:[%s1] sm:$0x3] %v9

// kernel: cls_logits_conv.1
$region0: #{cls_logits_conv.1}
  #allocation0 [shape = 'u32[]', space=smem, size = 0x4, offset = 0x4, fixed_abs, tag = 'smem constant byte address 0x4 - core index']
  #allocation1 [shape = 'u32[144,128]{1,0:T(1,128)}', space=vmem, size = 0x12000, scoped, tag = 'internal scratch']
  %s0 = inlined_call_operand.vmem [shape: bf16[2,16,512], index: 0, kind: input, shape index: {}]
  %s1 = inlined_call_operand.vmem [shape: bf16[128,128], index: 1, kind: input, shape index: {}]
  %s2 = inlined_call_operand.vmem [shape: f32[2,16,512], index: 2, kind: output, shape index: {}]
  %s3 = sld [smem:[#allocation0]]
  $region116: #{cls_logits_conv.1} parent=0
    _
  %s5 = ssub.s32 1, %s3
  %s6 = scalar_select 0, %s5, %s3
  $region1: #{cls_logits_conv.1} parent=0
    #allocation2 [shape = 'u8[8192]{0}', space=vmem, size = 0x2000, scoped, tag = 'input window, operand 0']
    #allocation3 [shape = 'u8[16384]{0}', space=vmem, size = 0x4000, scoped, tag = 'output window, operand 0']
    loop: start=0, step=1, limit=10
    $region2: #{cls_logits_conv.1} parent=1 // loop_pre_header
      _
    $region3: #{cls_logits_conv.1} parent=1 // loop_header
      %s8 = sphi 0, %s12
      %p9 = scmp.ge.s32.totalorder %s8, 10
      %s15 = sphi 0, %s34
      %s16 = sphi 0, %s30
      %s17 = sphi 0, %s26
      %s18 = sphi 0, %s15
      %s19 = sphi 0, %s16
      %s20 = sphi 0, %s17
      %s21 = sphi 0, %s18
      %s22 = sphi 0, %s19
      %s23 = sphi 0, %s20
      %s41 = sphi 0, %s43
      %s44 = sphi 0, %s41
      %s45 = sphi 0, %s44
      %s61 = sphi 0, %s45
      %s65 = sphi 0, %s65
      %s67 = sphi 0, %s65
      %s68 = sphi 0, %s67
      %s82 = sphi 0, %s68
      %s92 = sphi 0, %s94
      %s95 = sphi 0, %s92
      %s96 = sphi 0, %s95
      %s112 = sphi 0, %s96
    $region4: #{cls_logits_conv.1} parent=1 // loop_header_branch
      %11 = sbr.rel (%p9) target = $region8
    $region5: #{cls_logits_conv.1} parent=1 // loop_body
      %s13 = ssub.s32 %s8, 1
      %s14 = ssub.s32 %s8, 2
      %s24 = sadd.s32 1, %s17
      %p25 = scmp.ge.s32.totalorder %s24, 1
      %s26 = scalar_select %p25, 0, %s24
      %s27 = sadd.s32 1, %s16
      %s28 = scalar_select %p25, %s27, %s16
      %p29 = scmp.ge.s32.totalorder %s28, 4
      %s30 = scalar_select %p29, 0, %s28
      %s31 = sadd.s32 1, %s15
      %s32 = scalar_select %p29, %s31, %s15
      %p33 = scmp.ge.s32.totalorder %s32, 2
      %s34 = scalar_select %p33, 0, %s32
      %s35 = ssub.s32 %s15, %s34
      %s36 = ssub.s32 %s17, %s26
      %s37 = sor.u32 %s35, %s36
      %s38 = ssub.s32 %s16, %s30
      %s39 = sor.u32 %s37, %s38
      %p40 = scmp.eq.s32.totalorder %s39, 0
      %s42 = sadd.s32 %s41, 1
      %s43 = scalar_select %p40, %s41, %s42
      %p46 = pneg %p40
      %p47 = scmp.eq.s32.totalorder %s8, 7
      %p48 = por %p46, %p47
      %p49 = scmp.ne.s32.totalorder %s41, %s44
      %p50 = scmp.eq.s32.totalorder %s8, 0
      %p51 = por %p49, %p50
      %p52 = scmp.ne.s32.totalorder %s41, %s44
      %p53 = scmp.eq.s32.totalorder %s13, 7
      %p54 = por %p52, %p53
      %p55 = scmp.ne.s32.totalorder %s44, %s45
      %p56 = scmp.eq.s32.totalorder %s13, 0
      %p57 = por %p55, %p56
      %p58 = scmp.ne.s32.totalorder %s44, %s45
      %p59 = scmp.eq.s32.totalorder %s14, 7
      %p60 = por %p58, %p59
      %p62 = scmp.ne.s32.totalorder %s45, %s61
      %p63 = scmp.eq.s32.totalorder %s14, 0
      %p64 = por %p62, %p63
      %s66 = sadd.s32 %s65, 1
      %p69 = scmp.eq.s32.totalorder %s8, 7
      %p70 = scmp.ne.s32.totalorder %s65, %s67
      %p71 = scmp.eq.s32.totalorder %s8, 0
      %p72 = por %p70, %p71
      %p73 = scmp.ne.s32.totalorder %s65, %s67
      %p74 = scmp.eq.s32.totalorder %s13, 7
      %p75 = por %p73, %p74
      %p76 = scmp.ne.s32.totalorder %s67, %s68
      %p77 = scmp.eq.s32.totalorder %s13, 0
      %p78 = por %p76, %p77
      %p79 = scmp.ne.s32.totalorder %s67, %s68
      %p80 = scmp.eq.s32.totalorder %s14, 7
      %p81 = por %p79, %p80
      %p83 = scmp.ne.s32.totalorder %s68, %s82
      %p84 = scmp.eq.s32.totalorder %s14, 0
      %p85 = por %p83, %p84
      %s86 = ssub.s32 %s15, %s34
      %s87 = ssub.s32 %s17, %s26
      %s88 = sor.u32 %s86, %s87
      %s89 = ssub.s32 %s16, %s30
      %s90 = sor.u32 %s88, %s89
      %p91 = scmp.eq.s32.totalorder %s90, 0
      %s93 = sadd.s32 %s92, 1
      %s94 = scalar_select %p91, %s92, %s93
      %p97 = pneg %p91
      %p98 = scmp.eq.s32.totalorder %s8, 7
      %p99 = por %p97, %p98
      %p100 = scmp.ne.s32.totalorder %s92, %s95
      %p101 = scmp.eq.s32.totalorder %s8, 0
      %p102 = por %p100, %p101
      %p103 = scmp.ne.s32.totalorder %s92, %s95
      %p104 = scmp.eq.s32.totalorder %s13, 7
      %p105 = por %p103, %p104
      %p106 = scmp.ne.s32.totalorder %s95, %s96
      %p107 = scmp.eq.s32.totalorder %s13, 0
      %p108 = por %p106, %p107
      %p109 = scmp.ne.s32.totalorder %s95, %s96
      %p110 = scmp.eq.s32.totalorder %s14, 7
      %p111 = por %p109, %p110
      %p113 = scmp.ne.s32.totalorder %s96, %s112
      %p114 = scmp.eq.s32.totalorder %s14, 0
      %p115 = por %p113, %p114
      %p116 = scmp.le.s32.totalorder 1, %s8
      %p117 = scmp.lt.s32.totalorder %s8, 9
      %p118 = pnand %p116, %p117
      %p119 = pneg %p118
      // Predicated region
      $region9: #{cls_logits_conv.1} parent=5 // pred_check
        _
      $region10: #{cls_logits_conv.1} parent=5 // pred_check_branch
        %121 = sbr.rel (%p118) target = $region12
      $region11: #{cls_logits_conv.1} parent=5 // pred_region
        %s122 = ssub.s32 %s8, 1
        // Predicated region
        $region13: #{cls_logits_conv.1} parent=11 // pred_check
          %p123 = pneg %p78
        $region14: #{cls_logits_conv.1} parent=11 // pred_check_branch
          %125 = sbr.rel (%p123) target = $region16
        $region15: #{cls_logits_conv.1} parent=11 // pred_region
          _
        $region16: #{cls_logits_conv.1} parent=11 // pred_fallthru
          _
      $region12: #{cls_logits_conv.1} parent=5 // pred_fallthru
        _
      %p126 = scmp.lt.s32.totalorder %s8, 8
      // Predicated region
      $region17: #{cls_logits_conv.1} parent=5 // pred_check
        %p127 = pneg %p126
      $region18: #{cls_logits_conv.1} parent=5 // pred_check_branch
        %129 = sbr.rel (%p127) target = $region20
      $region19: #{cls_logits_conv.1} parent=5 // pred_region
        // Predicated region
        $region21: #{cls_logits_conv.1} parent=19 // pred_check
          %p130 = pneg %p51
        $region22: #{cls_logits_conv.1} parent=19 // pred_check_branch
          %132 = sbr.rel (%p130) target = $region24
        $region23: #{cls_logits_conv.1} parent=19 // pred_region
          %s133 = sand.u32 %s41, 1
          %s134 = sand.u32 %s41, 1
          %s135 = smul.addr %s134, 8
          %s136 = scalar_lea.vmem [#allocation2], %s135
          %s137 = smul.u32 2, %s17
          %s138 = smul.addr %s137, 4
          %s139 = sadd.s32 %s16, %s138
          %s140 = smul.addr %s15, 8
          %s141 = sadd.s32 %s139, %s140
          %s142 = smul.addr %s141, 4
          %s143 = scalar_lea.vmem %s0, %s142
          // Predicated region
          $region25: #{cls_logits_conv.1} parent=23 // pred_check
            _
          $region26: #{cls_logits_conv.1} parent=23 // pred_check_branch
            %145 = sbr.rel (0) target = $region28
          $region27: #{cls_logits_conv.1} parent=23 // pred_region
            // Predicated region
            $region29: #{cls_logits_conv.1} parent=27 // pred_check
              _
            $region30: #{cls_logits_conv.1} parent=27 // pred_check_branch
              %147 = sbr.rel target = $region32
            $region31: #{cls_logits_conv.1} parent=27 // pred_region
              // Predicated region
              $region44: #{cls_logits_conv.1} parent=31 // pred_check
                _
              $region45: #{cls_logits_conv.1} parent=31 // pred_check_branch
                %164 = sbr.rel (0) target = $region47
              $region46: #{cls_logits_conv.1} parent=31 // pred_region
                loop: start=0, step=1, limit=1
                $region48: #{cls_logits_conv.1} parent=46 // loop_pre_header
                  _
                $region49: #{cls_logits_conv.1} parent=46 // loop_header
                  %s166 = sphi 0, %s170
                  %p167 = scmp.ge.s32.totalorder %s166, 1
                  %s171 = sphi %s143, %s143
                  %s172 = sphi %s136, %s136
                $region50: #{cls_logits_conv.1} parent=46 // loop_header_branch
                  %169 = sbr.rel (%p167) target = $region54
                $region51: #{cls_logits_conv.1} parent=46 // loop_body
                  _
                $region52: #{cls_logits_conv.1} parent=46 // loop_footer
                  %s170 = sadd.s32 1, %s166
                $region53: #{cls_logits_conv.1} parent=46 // loop_footer_branch
                  %165 = sbr.rel target = $region49
                $region54: #{cls_logits_conv.1} parent=46 // loop_exit
                  _
                loop: start=0, step=1, limit=1
                $region55: #{cls_logits_conv.1} parent=46 // loop_pre_header
                  _
                $region56: #{cls_logits_conv.1} parent=46 // loop_header
                  %s175 = sphi 0, %s179
                  %p176 = scmp.ge.s32.totalorder %s175, 1
                  %s180 = sphi %s143, %s143
                  %s181 = sphi %s136, %s136
                $region57: #{cls_logits_conv.1} parent=46 // loop_header_branch
                  %178 = sbr.rel (%p176) target = $region61
                $region58: #{cls_logits_conv.1} parent=46 // loop_body
                  %v182 = vld [vmem:[%s180] sm:$0xf]
                  %183 = vst [vmem:[%s181] sm:$0xf] %v182
                  %v184 = vld [vmem:[%s180 + $0x10] sm:$0xf]
                  %185 = vst [vmem:[%s181 + $0x4] sm:$0xf] %v184
                $region59: #{cls_logits_conv.1} parent=46 // loop_footer
                  %s179 = sadd.s32 1, %s175
                $region60: #{cls_logits_conv.1} parent=46 // loop_footer_branch
                  %174 = sbr.rel target = $region56
                $region61: #{cls_logits_conv.1} parent=46 // loop_exit
                  _
              $region47: #{cls_logits_conv.1} parent=31 // pred_fallthru
                _
            $region32: #{cls_logits_conv.1} parent=27 // pred_fallthru
              _
            // Predicated region
            $region33: #{cls_logits_conv.1} parent=27 // pred_check
              _
            $region34: #{cls_logits_conv.1} parent=27 // pred_check_branch
              %149 = sbr.rel (0) target = $region36
            $region35: #{cls_logits_conv.1} parent=27 // pred_region
              loop: start=0, step=1, limit=1
              $region37: #{cls_logits_conv.1} parent=35 // loop_pre_header
                _
              $region38: #{cls_logits_conv.1} parent=35 // loop_header
                %s152 = sphi 0, %s156
                %p153 = scmp.ge.s32.totalorder %s152, 1
                %s157 = sphi %s143, %s143
                %s158 = sphi %s136, %s136
              $region39: #{cls_logits_conv.1} parent=35 // loop_header_branch
                %155 = sbr.rel (%p153) target = $region43
              $region40: #{cls_logits_conv.1} parent=35 // loop_body
                %v159 = vld [vmem:[%s157] sm:$0xf]
                %160 = vst [vmem:[%s158] sm:$0xf] %v159
                %v161 = vld [vmem:[%s157 + $0x10] sm:$0xf]
                %162 = vst [vmem:[%s158 + $0x4] sm:$0xf] %v161
              $region41: #{cls_logits_conv.1} parent=35 // loop_footer
                %s156 = sadd.s32 1, %s152
              $region42: #{cls_logits_conv.1} parent=35 // loop_footer_branch
                %151 = sbr.rel target = $region38
              $region43: #{cls_logits_conv.1} parent=35 // loop_exit
                _
            $region36: #{cls_logits_conv.1} parent=27 // pred_fallthru
              _
          $region28: #{cls_logits_conv.1} parent=23 // pred_fallthru
            _
          %186 = vnop
        $region24: #{cls_logits_conv.1} parent=19 // pred_fallthru
          _
      $region20: #{cls_logits_conv.1} parent=5 // pred_fallthru
        _
      %p187 = scmp.le.s32.totalorder 1, %s8
      %p188 = scmp.lt.s32.totalorder %s8, 9
      %p189 = pnand %p187, %p188
      %p190 = pneg %p189
      // Predicated region
      $region62: #{cls_logits_conv.1} parent=5 // pred_check
        _
      $region63: #{cls_logits_conv.1} parent=5 // pred_check_branch
        %192 = sbr.rel (%p189) target = $region65
      $region64: #{cls_logits_conv.1} parent=5 // pred_region
        %s193 = ssub.s32 %s8, 1
        %s194 = sand.u32 %s44, 1
        %s195 = sand.u32 %s44, 1
        %s196 = smul.addr %s195, 8
        %s197 = scalar_lea.vmem [#allocation2], %s196
        // Predicated region
        $region66: #{cls_logits_conv.1} parent=64 // pred_check
          %p198 = pneg %p57
        $region67: #{cls_logits_conv.1} parent=64 // pred_check_branch
          %200 = sbr.rel (%p198) target = $region69
        $region68: #{cls_logits_conv.1} parent=64 // pred_region
          _
        $region69: #{cls_logits_conv.1} parent=64 // pred_fallthru
          _
        %s201 = sand.u32 %s44, 1
        %s202 = sand.u32 %s44, 1
        %s203 = smul.addr %s202, 8
        %s204 = scalar_lea.vmem [#allocation2], %s203
        %p205 = pneg %p57
        %p206 = pneg %p54
        %p207 = pneg %p78
        %p208 = pneg %p75
        %p209 = pneg %p108
        %p210 = pneg %p105
        %s211 = sand.u32 %s95, 1
        %s212 = sand.u32 %s95, 1
        %s213 = smul.addr %s212, 16
        %s214 = scalar_lea.vmem [#allocation3], %s213
        %s215 = smul.u32 2, %s20
        %s216 = smul.u32 2, %s20
        %v218 = vld [vmem:[%s197] sm:$0xf]
        %v219 = vld [vmem:[%s197 + $0x4] sm:$0xf]
        %v220 = vld [vmem:[%s1] sm:$0xf]
        %v221 = vld [vmem:[%s1 + $0x4] sm:$0xf]
        %v222 = vld [vmem:[%s1 + $0x8] sm:$0xf]
        %v223 = vld [vmem:[%s1 + $0xc] sm:$0xf]
        %v224 = vld [vmem:[%s1 + $0x10] sm:$0xf]
        %v225 = vld [vmem:[%s1 + $0x14] sm:$0xf]
        %v226 = vld [vmem:[%s1 + $0x18] sm:$0xf]
        %v227 = vld [vmem:[%s1 + $0x1c] sm:$0xf]
        %v228 = vld [vmem:[%s1 + $0x20] sm:$0xf]
        %v229 = vld [vmem:[%s1 + $0x24] sm:$0xf]
        %v230 = vld [vmem:[%s1 + $0x28] sm:$0xf]
        %v231 = vld [vmem:[%s1 + $0x2c] sm:$0xf]
        %v232 = vld [vmem:[%s1 + $0x30] sm:$0xf]
        %v233 = vld [vmem:[%s1 + $0x34] sm:$0xf]
        %v234 = vld [vmem:[%s1 + $0x38] sm:$0xf]
        %v235 = vld [vmem:[%s1 + $0x3c] sm:$0xf]
        %v238 = vunpack.c.l.b16 %v218
        %v239 = vunpack.c.l.b16 %v219
        %v240 = vpack.c.b16 %v239, %v238
        %v258 = vunpack.c.l.b16 %v220
        %v259 = vunpack.c.l.b16 %v221
        %v260 = vunpack.c.l.b16 %v222
        %v261 = vunpack.c.l.b16 %v223
        %v262 = vunpack.c.l.b16 %v224
        %v263 = vunpack.c.l.b16 %v225
        %v264 = vunpack.c.l.b16 %v226
        %v265 = vunpack.c.l.b16 %v227
        %v266 = vunpack.c.l.b16 %v228
        %v267 = vunpack.c.l.b16 %v229
        %v268 = vunpack.c.l.b16 %v230
        %v269 = vunpack.c.l.b16 %v231
        %v270 = vunpack.c.l.b16 %v232
        %v271 = vunpack.c.l.b16 %v233
        %v272 = vunpack.c.l.b16 %v234
        %v273 = vunpack.c.l.b16 %v235
        %v274 = vpack.c.b16 %v259, %v258
        %v275 = vpack.c.b16 %v261, %v260
        %v276 = vpack.c.b16 %v263, %v262
        %v277 = vpack.c.b16 %v265, %v264
        %v278 = vpack.c.b16 %v267, %v266
        %v279 = vpack.c.b16 %v269, %v268
        %v280 = vpack.c.b16 %v271, %v270
        %v281 = vpack.c.b16 %v273, %v272
        %290 = vmatprep.subr.bf16.mxu0 0
        %291 = vmatpush1.bf16.msra.mxu0 %v274
        %292 = vmatprep.subr.bf16.mxu0 0
        %293 = vmatpush1.bf16.msra.mxu0 %v275
        %294 = vmatprep.subr.bf16.mxu0 0
        %295 = vmatpush1.bf16.msra.mxu0 %v276
        %296 = vmatprep.subr.bf16.mxu0 0
        %297 = vmatpush1.bf16.msra.mxu0 %v277
        %298 = vmatprep.subr.bf16.mxu0 0
        %299 = vmatpush1.bf16.msra.mxu0 %v278
        %300 = vmatprep.subr.bf16.mxu0 0
        %301 = vmatpush1.bf16.msra.mxu0 %v279
        %302 = vmatprep.subr.bf16.mxu0 0
        %303 = vmatpush1.bf16.msra.mxu0 %v280
        %304 = vmatprep.subr.bf16.mxu0 0
        %305 = vmatpush1.bf16.msra.mxu0 %v281
        %306 = vmatprep.subr.bf16.mxu0 0
        %307 = vmatpush1.bf16.msra.mxu0 0
        %308 = vmatprep.subr.bf16.mxu0 0
        %309 = vmatpush1.bf16.msra.mxu0 0
        %310 = vmatprep.subr.bf16.mxu0 0
        %311 = vmatpush1.bf16.msra.mxu0 0
        %312 = vmatprep.subr.bf16.mxu0 0
        %313 = vmatpush1.bf16.msra.mxu0 0
        %314 = vmatprep.subr.bf16.mxu0 0
        %315 = vmatpush1.bf16.msra.mxu0 0
        %316 = vmatprep.subr.bf16.mxu0 0
        %317 = vmatpush1.bf16.msra.mxu0 0
        %318 = vmatprep.subr.bf16.mxu0 0
        %319 = vmatpush1.bf16.msra.mxu0 0
        %320 = vmatprep.subr.bf16.mxu0 0
        %321 = vmatpush1.bf16.msra.mxu0 0
        %322 = vmatprep.mubr.bf16.mxu0 0
        %323 = vmatmul.mubr.bf16.gmra.mrb[0].mxu0 %v240
        %v324 = vpop.f32.mrb[0].mxu0
        %v325 = vadd.f32 0.0, %v324
        %v326 = vpop.f32.mrb[0].mxu0
        %v327 = vpop.f32.mrb[0].mxu0
        %v328 = vadd.f32 0.0, %v327
        %v329 = vpop.f32.mrb[0].mxu0
        %330 = vdwg.mxu0
        %331 = vst [vmem:[%s214] sm:$0xff] %v325
        %332 = vst [vmem:[%s214 + $0x8] sm:$0xff] %v328
        %s333 = sand.u32 %s95, 1
        %s334 = sand.u32 %s95, 1
        %s335 = smul.addr %s334, 16
        %s336 = scalar_lea.vmem [#allocation3], %s335
        // Predicated region
        $region70: #{cls_logits_conv.1} parent=64 // pred_check
          %p337 = pneg %p105
        $region71: #{cls_logits_conv.1} parent=64 // pred_check_branch
          %339 = sbr.rel (%p337) target = $region73
        $region72: #{cls_logits_conv.1} parent=64 // pred_region
          %s340 = smul.u32 2, %s20
          %s341 = smul.addr %s340, 4
          %s342 = sadd.s32 %s19, %s341
          %s343 = smul.addr %s18, 8
          %s344 = sadd.s32 %s342, %s343
          %s345 = smul.addr %s344, 8
          %s346 = scalar_lea.vmem %s2, %s345
          // Predicated region
          $region74: #{cls_logits_conv.1} parent=72 // pred_check
            _
          $region75: #{cls_logits_conv.1} parent=72 // pred_check_branch
            %348 = sbr.rel (0) target = $region77
          $region76: #{cls_logits_conv.1} parent=72 // pred_region
            // Predicated region
            $region78: #{cls_logits_conv.1} parent=76 // pred_check
              _
            $region79: #{cls_logits_conv.1} parent=76 // pred_check_branch
              %350 = sbr.rel (0) target = $region81
            $region80: #{cls_logits_conv.1} parent=76 // pred_region
              // Predicated region
              $region93: #{cls_logits_conv.1} parent=80 // pred_check
                _
              $region94: #{cls_logits_conv.1} parent=80 // pred_check_branch
                %367 = sbr.rel (0) target = $region96
              $region95: #{cls_logits_conv.1} parent=80 // pred_region
                loop: start=0, step=1, limit=1
                $region97: #{cls_logits_conv.1} parent=95 // loop_pre_header
                  _
                $region98: #{cls_logits_conv.1} parent=95 // loop_header
                  %s369 = sphi 0, %s373
                  %p370 = scmp.ge.s32.totalorder %s369, 1
                  %s374 = sphi %s336, %s336
                  %s375 = sphi %s346, %s346
                $region99: #{cls_logits_conv.1} parent=95 // loop_header_branch
                  %372 = sbr.rel (%p370) target = $region103
                $region100: #{cls_logits_conv.1} parent=95 // loop_body
                  %v376 = vld [vmem:[%s374] sm:$0xff]
                  %377 = vst [vmem:[%s375] sm:$0xff] %v376
                  %v378 = vld [vmem:[%s374 + $0x8] sm:$0xff]
                  %379 = vst [vmem:[%s375 + $0x20] sm:$0xff] %v378
                $region101: #{cls_logits_conv.1} parent=95 // loop_footer
                  %s373 = sadd.s32 1, %s369
                $region102: #{cls_logits_conv.1} parent=95 // loop_footer_branch
                  %368 = sbr.rel target = $region98
                $region103: #{cls_logits_conv.1} parent=95 // loop_exit
                  _
              $region96: #{cls_logits_conv.1} parent=80 // pred_fallthru
                _
              // Predicated region
              $region104: #{cls_logits_conv.1} parent=80 // pred_check
                _
              $region105: #{cls_logits_conv.1} parent=80 // pred_check_branch
                %381 = sbr.rel target = $region107
              $region106: #{cls_logits_conv.1} parent=80 // pred_region
                _
              $region107: #{cls_logits_conv.1} parent=80 // pred_fallthru
                _
            $region81: #{cls_logits_conv.1} parent=76 // pred_fallthru
              _
            // Predicated region
            $region82: #{cls_logits_conv.1} parent=76 // pred_check
              _
            $region83: #{cls_logits_conv.1} parent=76 // pred_check_branch
              %352 = sbr.rel target = $region85
            $region84: #{cls_logits_conv.1} parent=76 // pred_region
              loop: start=0, step=1, limit=1
              $region86: #{cls_logits_conv.1} parent=84 // loop_pre_header
                _
              $region87: #{cls_logits_conv.1} parent=84 // loop_header
                %s355 = sphi 0, %s359
                %p356 = scmp.ge.s32.totalorder %s355, 1
                %s360 = sphi %s336, %s336
                %s361 = sphi %s346, %s346
              $region88: #{cls_logits_conv.1} parent=84 // loop_header_branch
                %358 = sbr.rel (%p356) target = $region92
              $region89: #{cls_logits_conv.1} parent=84 // loop_body
                %v362 = vld [vmem:[%s360] sm:$0xff]
                %363 = vst [vmem:[%s361] sm:$0xff] %v362
                %v364 = vld [vmem:[%s360 + $0x8] sm:$0xff]
                %365 = vst [vmem:[%s361 + $0x20] sm:$0xff] %v364
              $region90: #{cls_logits_conv.1} parent=84 // loop_footer
                %s359 = sadd.s32 1, %s355
              $region91: #{cls_logits_conv.1} parent=84 // loop_footer_branch
                %354 = sbr.rel target = $region87
              $region92: #{cls_logits_conv.1} parent=84 // loop_exit
                _
            $region85: #{cls_logits_conv.1} parent=76 // pred_fallthru
              _
          $region77: #{cls_logits_conv.1} parent=72 // pred_fallthru
            _
          %382 = vnop
        $region73: #{cls_logits_conv.1} parent=64 // pred_fallthru
          _
      $region65: #{cls_logits_conv.1} parent=5 // pred_fallthru
        _
      %p383 = scmp.le.s32.totalorder 2, %s8
      // Predicated region
      $region108: #{cls_logits_conv.1} parent=5 // pred_check
        %p384 = pneg %p383
      $region109: #{cls_logits_conv.1} parent=5 // pred_check_branch
        %386 = sbr.rel (%p384) target = $region111
      $region110: #{cls_logits_conv.1} parent=5 // pred_region
        %s387 = ssub.s32 %s8, 2
        // Predicated region
        $region112: #{cls_logits_conv.1} parent=110 // pred_check
          %p388 = pneg %p111
        $region113: #{cls_logits_conv.1} parent=110 // pred_check_branch
          %390 = sbr.rel (%p388) target = $region115
        $region114: #{cls_logits_conv.1} parent=110 // pred_region
          %s391 = sand.u32 %s96, 1
          %s392 = sand.u32 %s96, 1
          %s393 = smul.addr %s392, 16
          %s394 = scalar_lea.vmem [#allocation3], %s393
        $region115: #{cls_logits_conv.1} parent=110 // pred_fallthru
          _
      $region111: #{cls_logits_conv.1} parent=5 // pred_fallthru
        _
    $region6: #{cls_logits_conv.1} parent=1 // loop_footer
      %s12 = sadd.s32 1, %s8
    $region7: #{cls_logits_conv.1} parent=1 // loop_footer_branch
      %7 = sbr.rel target = $region3
    $region8: #{cls_logits_conv.1} parent=1 // loop_exit
      _

</llo_original>
